<compile_context>
chip_gen: v7x
topology: tpu7x:2x2x1
jax: 0.10.0
libtpu: 0.0.40
codegen_flags: <defaults>
</compile_context>

<pallas_src>
import math

import jax
import jax.numpy as jnp
import numpy as np
from jax.experimental import pallas as pl
from jax.experimental.pallas import tpu as pltpu


# ---------------------------------------------------------------------------
# Pallas kernel: 3-layer MLP on one transposed activation block.
#   stt_ref: (Ds, TB)   act_ref: (Da, TB)
#   w1s: (H1, Ds)  w1a: (H1, Da)  b1: (H1, 1)
#   w2:  (H2, H1)  b2: (H2, 1)
#   w3:  (Do, H2)  b3: (Do, 1)
#   out_ref: (Do, TB)
# ---------------------------------------------------------------------------
def _critic_kernel(stt_ref, act_ref, w1s_ref, w1a_ref, b1_ref,
                   w2_ref, b2_ref, w3_ref, b3_ref, out_ref):
    # Layer 1 (fused concat): relu(W1_s @ stt^T + W1_a @ act^T + b1)
    h = jnp.dot(w1s_ref[...], stt_ref[...].astype(w1s_ref.dtype),
                preferred_element_type=jnp.float32)
    h = h + jnp.dot(w1a_ref[...], act_ref[...].astype(w1a_ref.dtype),
                    preferred_element_type=jnp.float32)
    h = jnp.maximum(h + b1_ref[...], 0.0)          # f32 epilogue (v5e-safe)
    # Layer 2: relu(W2 @ h + b2)
    h = jnp.dot(w2_ref[...], h.astype(w2_ref.dtype),
                preferred_element_type=jnp.float32)
    h = jnp.maximum(h + b2_ref[...], 0.0)
    # Layer 3: W3 @ h + b3   -> lane-dense (1, TB) output row
    out_ref[...] = (jnp.dot(w3_ref[...], h.astype(w3_ref.dtype),
                            preferred_element_type=jnp.float32)
                    + b3_ref[...])


# ---------------------------------------------------------------------------
# One-time parameter conversion (torch [out, in] layout kept; no transposes).
# ---------------------------------------------------------------------------
def prepare_critic_params(torch_params, state_dim, s_max,
                          dtype=jnp.float32, negate=False):
    """Split W1 into (state, action) column blocks, fold 1/s_max into the state
    block, reshape biases to [out, 1], optionally fold a -1 into W3/b3 (exact).
    Biases stay f32 regardless of `dtype`.  Call once; reuse every forward."""
    w1, b1, w2, b2, w3, b3 = (jnp.asarray(p, jnp.float32) for p in torch_params)
    w1s = (w1[:, :state_dim] * (1.0 / s_max)).astype(dtype)   # (H1, Ds)
    w1a = w1[:, state_dim:].astype(dtype)                     # (H1, Da)
    sign = -1.0 if negate else 1.0
    return (w1s, w1a, b1.reshape(-1, 1),
            w2.astype(dtype), b2.reshape(-1, 1),
            (sign * w3).astype(dtype), sign * b3.reshape(-1, 1))


def _pick_batch_tile(b, cap=8192):
    """Lane-dense batch tile: a multiple of 128, at most `cap`, and roughly
    ceil(b/2) so that any batch large enough to split gives >= 2 grid steps
    (keeps both v7x TensorCores busy).  VMEM is not the constraint here."""
    half = -(-b // 2)                          # cdiv(b, 2)
    tb = ((half + 127) // 128) * 128           # round up to a lane multiple
    return max(128, min(cap, tb))


# ---------------------------------------------------------------------------
# Critic forward: critic(stt, act) with params from prepare_critic_params.
#   stt: (B, Ds)   act: (B, Da)   ->   (B, Dout) f32
# ---------------------------------------------------------------------------
@jax.jit
def critic_forward(stt, act, params):
    w1s, w1a, b1, w2, b2, w3, b3 = params
    b = stt.shape[0]
    ds, da = w1s.shape[1], w1a.shape[1]
    h1, h2, dout = w1s.shape[0], w2.shape[0], w3.shape[0]

    cdt = w1s.dtype                            # bf16 weights -> bf16 input DMA
    stt_t = stt.reshape(b, ds).T.astype(cdt)   # (Ds, B)  batch on lanes
    act_t = act.reshape(b, da).T.astype(cdt)   # (Da, B)

    tb = _pick_batch_tile(b)
    n_blocks = -(-b // tb)
    b_pad = n_blocks * tb
    if b_pad != b:                             # pad ragged batch (sliced off below)
        stt_t = jnp.pad(stt_t, ((0, 0), (0, b_pad - b)))
        act_t = jnp.pad(act_t, ((0, 0), (0, b_pad - b)))

    resident = lambda i: (0, 0)                # weights/biases stay in VMEM
    flops = 2 * b_pad * (ds * h1 + da * h1 + h1 * h2 + h2 * dout)
    bytes_accessed = ((stt_t.size + act_t.size) * stt_t.dtype.itemsize
                      + dout * b_pad * 4
                      + sum(p.size * p.dtype.itemsize for p in params))

    out_t = pl.pallas_call(
        _critic_kernel,
        out_shape=jax.ShapeDtypeStruct((dout, b_pad), jnp.float32),
        grid=(n_blocks,),
        in_specs=[
            pl.BlockSpec((ds, tb), lambda i: (0, i)),    # streamed stt^T
            pl.BlockSpec((da, tb), lambda i: (0, i)),    # streamed act^T
            pl.BlockSpec((h1, ds), resident),
            pl.BlockSpec((h1, da), resident),
            pl.BlockSpec((h1, 1), resident),
            pl.BlockSpec((h2, h1), resident),
            pl.BlockSpec((h2, 1), resident),
            pl.BlockSpec((dout, h2), resident),
            pl.BlockSpec((dout, 1), resident),
        ],
        out_specs=pl.BlockSpec((dout, tb), lambda i: (0, i)),
        compiler_params=pltpu.CompilerParams(
            dimension_semantics=("parallel",),           # v7x 2-TC sharding
        ),
        cost_estimate=pl.CostEstimate(
            flops=flops, transcendentals=0, bytes_accessed=bytes_accessed),
    )(stt_t, act_t, w1s, w1a, b1, w2, b2, w3, b3)

    return out_t[:, :b].T                                # (B, Dout)


# ---------------------------------------------------------------------------
# Ave_D_Loss.forward  (params must be prepared with negate=True: -1 is folded)
# ---------------------------------------------------------------------------
@jax.jit
def ave_d_loss_forward(in_x, load_mtx, neg_params):
    x_final = in_x
    stt = load_mtx.reshape(1, -1)          # load_mtx.view(-1).unsqueeze(0)
    act = in_x.reshape(1, -1)              # x_portion.view(-1).unsqueeze(0)
    ave_delay = critic_forward(stt, act, neg_params)   # -1 folded into W3/b3
    return x_final, ave_delay


# ---------------------------------------------------------------------------
# Helpers: deterministic torch.nn.Linear-style init + exact float64 references.
# ---------------------------------------------------------------------------
def _init_linear(key, fan_in, fan_out):
    kw, kb = jax.random.split(key)
    bound = 1.0 / math.sqrt(fan_in)
    w = jax.random.uniform(kw, (fan_out, fan_in), jnp.float32, -bound, bound)
    b = jax.random.uniform(kb, (fan_out,), jnp.float32, -bound, bound)
    return w, b


def _reference_critic_np(stt, act, torch_params, s_max):
    w1, b1, w2, b2, w3, b3 = (np.asarray(p, np.float64) for p in torch_params)
    x = np.concatenate([np.asarray(stt, np.float64) / s_max,
                        np.asarray(act, np.float64)], axis=1)
    x = np.maximum(x @ w1.T + b1, 0.0)
    x = np.maximum(x @ w2.T + b2, 0.0)
    return x @ w3.T + b3


def _reference_ave_delay_np(load_mtx, in_x, torch_params, s_max):
    stt = np.asarray(load_mtx, np.float64).reshape(1, -1)
    act = np.asarray(in_x, np.float64).reshape(1, -1)
    return -_reference_critic_np(stt, act, torch_params, s_max)


if __name__ == "__main__":
    # Small, module-consistent shapes.
    N_node_in, N_node_out = 4, 6
    state_dim = N_node_in * N_node_out        # flattened load matrix -> 24
    act_shape = (N_node_in, 2)                # x_portion -> flattens to 8
    act_dim = int(np.prod(act_shape))
    input_size = state_dim + act_dim          # 32
    hidden_size = 32
    output_size = 1
    s_max = 10.0                              # s_mean/s_std unused by forward

    key = jax.random.PRNGKey(0)
    k_load, k_x, k1, k2, k3 = jax.random.split(key, 5)

    load_mtx = jax.random.uniform(k_load, (N_node_in, N_node_out), jnp.float32) * s_max
    in_x = jax.random.uniform(k_x, act_shape, jnp.float32)

    w1, b1 = _init_linear(k1, input_size, hidden_size)
    w2, b2 = _init_linear(k2, hidden_size, hidden_size // 2)
    w3, b3 = _init_linear(k3, hidden_size // 2, output_size)
    torch_params = (w1, b1, w2, b2, w3, b3)

    # One-time param conversions.
    neg_params = prepare_critic_params(torch_params, state_dim, s_max, negate=True)
    params = prepare_critic_params(torch_params, state_dim, s_max)

    # Default-precision MXU matmuls use bf16 operand passes and the 1/s_max and
    # -1 folds change operand rounding, so compare against an exact float64
    # reference at a tolerance reflecting bf16 operand precision.
    TOL = dict(rtol=2e-2, atol=2e-2)

    # --- Ave_D_Loss forward (batch 1, module semantics) ----------------------
    x_final, ave_delay = ave_d_loss_forward(in_x, load_mtx, neg_params)
    x_final, ave_delay = jax.block_until_ready((x_final, ave_delay))
    ref_delay = _reference_ave_delay_np(load_mtx, in_x, torch_params, s_max)
    np.testing.assert_allclose(np.asarray(ave_delay), ref_delay, **TOL)
    np.testing.assert_allclose(np.asarray(x_final), np.asarray(in_x))

    # --- Batched critic path (exercises the lane-dense, >=2-step grid) -------
    bB = 4096                                  # tb=2048 -> 2 parallel grid steps
    kb1, kb2 = jax.random.split(jax.random.PRNGKey(1))
    stt_b = jax.random.uniform(kb1, (bB, state_dim), jnp.float32) * s_max
    act_b = jax.random.uniform(kb2, (bB, act_dim), jnp.float32)
    out_b = jax.block_until_ready(critic_forward(stt_b, act_b, params))
    ref_b = _reference_critic_np(stt_b, act_b, torch_params, s_max)
    np.testing.assert_allclose(np.asarray(out_b), ref_b, **TOL)

    # --- Ragged batch (padded last block) -------------------------------------
    out_r = jax.block_until_ready(critic_forward(stt_b[:1000], act_b[:1000], params))
    np.testing.assert_allclose(np.asarray(out_r), ref_b[:1000], **TOL)

    # --- bf16-weight fast path (bf16 DMA/MXU operands, f32 epilogue) ----------
    params_bf16 = prepare_critic_params(torch_params, state_dim, s_max,
                                        dtype=jnp.bfloat16)
    out_b16 = jax.block_until_ready(critic_forward(stt_b, act_b, params_bf16))
    np.testing.assert_allclose(np.asarray(out_b16), ref_b, **TOL)

    print("KERNEL_OK")
</pallas_src>

<mosaic_0001>
module attributes {stable_mosaic.version = 11 : i64} {
  func.func @_critic_kernel(%arg0: i32, %arg1: memref<24x128xf32, #tpu.memory_space<vmem>>, %arg2: memref<8x128xf32, #tpu.memory_space<vmem>>, %arg3: memref<32x24xf32, #tpu.memory_space<vmem>>, %arg4: memref<32x8xf32, #tpu.memory_space<vmem>>, %arg5: memref<32x1xf32, #tpu.memory_space<vmem>>, %arg6: memref<16x32xf32, #tpu.memory_space<vmem>>, %arg7: memref<16x1xf32, #tpu.memory_space<vmem>>, %arg8: memref<1x16xf32, #tpu.memory_space<vmem>>, %arg9: memref<1x1xf32, #tpu.memory_space<vmem>>, %arg10: memref<1x128xf32, #tpu.memory_space<vmem>>) attributes {dimension_semantics = [#tpu.dimension_semantics<parallel>], iteration_bounds = array<i64: 1>, scalar_prefetch = 0 : i64, scratch_operands = 0 : i64, tpu.core_type = #tpu.core_type<tc>, window_params = [{transform_indices = @transform_0, window_bounds = array<i64: 24, 128>}, {transform_indices = @transform_1, window_bounds = array<i64: 8, 128>}, {pipeline_mode = #tpu.pipeline_mode<synchronous>, transform_indices = @transform_2, window_bounds = array<i64: 32, 24>}, {pipeline_mode = #tpu.pipeline_mode<synchronous>, transform_indices = @transform_3, window_bounds = array<i64: 32, 8>}, {pipeline_mode = #tpu.pipeline_mode<synchronous>, transform_indices = @transform_4, window_bounds = array<i64: 32, 1>}, {pipeline_mode = #tpu.pipeline_mode<synchronous>, transform_indices = @transform_5, window_bounds = array<i64: 16, 32>}, {pipeline_mode = #tpu.pipeline_mode<synchronous>, transform_indices = @transform_6, window_bounds = array<i64: 16, 1>}, {pipeline_mode = #tpu.pipeline_mode<synchronous>, transform_indices = @transform_7, window_bounds = array<i64: 1, 16>}, {pipeline_mode = #tpu.pipeline_mode<synchronous>, transform_indices = @transform_8, window_bounds = array<i64: 1, 1>}, {transform_indices = @transform_9, window_bounds = array<i64: 1, 128>}]} {
    %c0 = arith.constant 0 : index
    %c0_0 = arith.constant 0 : index
    %0 = vector.load %arg3[%c0, %c0_0] : memref<32x24xf32, #tpu.memory_space<vmem>>, vector<32x24xf32>
    %c0_1 = arith.constant 0 : index
    %c0_2 = arith.constant 0 : index
    %1 = vector.load %arg1[%c0_1, %c0_2] : memref<24x128xf32, #tpu.memory_space<vmem>>, vector<24x128xf32>
    %cst = arith.constant dense<0.000000e+00> : vector<32x128xf32>
    %2 = tpu.matmul %0, %1, %cst {dimension_numbers = #tpu.dot_dimension_numbers<[1], [0], [0], [1], [0, 0, 1, 1], [], []>} : vector<32x24xf32>, vector<24x128xf32>, vector<32x128xf32> -> vector<32x128xf32>
    %c0_3 = arith.constant 0 : index
    %c0_4 = arith.constant 0 : index
    %3 = vector.load %arg4[%c0_3, %c0_4] : memref<32x8xf32, #tpu.memory_space<vmem>>, vector<32x8xf32>
    %c0_5 = arith.constant 0 : index
    %c0_6 = arith.constant 0 : index
    %4 = vector.load %arg2[%c0_5, %c0_6] : memref<8x128xf32, #tpu.memory_space<vmem>>, vector<8x128xf32>
    %cst_7 = arith.constant dense<0.000000e+00> : vector<32x128xf32>
    %5 = tpu.matmul %3, %4, %cst_7 {dimension_numbers = #tpu.dot_dimension_numbers<[1], [0], [0], [1], [0, 0, 1, 1], [], []>} : vector<32x8xf32>, vector<8x128xf32>, vector<32x128xf32> -> vector<32x128xf32>
    %6 = arith.addf %2, %5 : vector<32x128xf32>
    %c0_8 = arith.constant 0 : index
    %c0_9 = arith.constant 0 : index
    %7 = vector.load %arg5[%c0_8, %c0_9] : memref<32x1xf32, #tpu.memory_space<vmem>>, vector<32x1xf32>
    %8 = vector.broadcast %7 : vector<32x1xf32> to vector<32x128xf32>
    %9 = arith.addf %6, %8 : vector<32x128xf32>
    %cst_10 = arith.constant 0.000000e+00 : f32
    %10 = vector.broadcast %cst_10 : f32 to vector<32x128xf32>
    %11 = arith.maximumf %9, %10 : vector<32x128xf32>
    %c0_11 = arith.constant 0 : index
    %c0_12 = arith.constant 0 : index
    %12 = vector.load %arg6[%c0_11, %c0_12] : memref<16x32xf32, #tpu.memory_space<vmem>>, vector<16x32xf32>
    %cst_13 = arith.constant dense<0.000000e+00> : vector<16x128xf32>
    %13 = tpu.matmul %12, %11, %cst_13 {dimension_numbers = #tpu.dot_dimension_numbers<[1], [0], [0], [1], [0, 0, 1, 1], [], []>} : vector<16x32xf32>, vector<32x128xf32>, vector<16x128xf32> -> vector<16x128xf32>
    %c0_14 = arith.constant 0 : index
    %c0_15 = arith.constant 0 : index
    %14 = vector.load %arg7[%c0_14, %c0_15] : memref<16x1xf32, #tpu.memory_space<vmem>>, vector<16x1xf32>
    %15 = vector.broadcast %14 : vector<16x1xf32> to vector<16x128xf32>
    %16 = arith.addf %13, %15 : vector<16x128xf32>
    %cst_16 = arith.constant 0.000000e+00 : f32
    %17 = vector.broadcast %cst_16 : f32 to vector<16x128xf32>
    %18 = arith.maximumf %16, %17 : vector<16x128xf32>
    %c0_17 = arith.constant 0 : index
    %c0_18 = arith.constant 0 : index
    %19 = vector.load %arg8[%c0_17, %c0_18] : memref<1x16xf32, #tpu.memory_space<vmem>>, vector<1x16xf32>
    %cst_19 = arith.constant dense<0.000000e+00> : vector<1x128xf32>
    %20 = tpu.matmul %19, %18, %cst_19 {dimension_numbers = #tpu.dot_dimension_numbers<[1], [0], [0], [1], [0, 0, 1, 1], [], []>} : vector<1x16xf32>, vector<16x128xf32>, vector<1x128xf32> -> vector<1x128xf32>
    %c0_20 = arith.constant 0 : index
    %c0_21 = arith.constant 0 : index
    %21 = vector.load %arg9[%c0_20, %c0_21] : memref<1x1xf32, #tpu.memory_space<vmem>>, vector<1x1xf32>
    %22 = vector.broadcast %21 : vector<1x1xf32> to vector<1x128xf32>
    %23 = arith.addf %20, %22 : vector<1x128xf32>
    %c0_22 = arith.constant 0 : index
    %c0_23 = arith.constant 0 : index
    %24 = vector.load %arg10[%c0_22, %c0_23] : memref<1x128xf32, #tpu.memory_space<vmem>>, vector<1x128xf32>
    tpu.vector_store %arg10[%c0_22, %c0_23], %23 {strides = array<i32>} : memref<1x128xf32, #tpu.memory_space<vmem>>, vector<1x128xf32>,
    return
  }
  func.func @transform_0(%arg0: i32) -> (i32, i32) {
    %c0_i32 = arith.constant 0 : i32
    %c0_i32_0 = arith.constant 0 : i32
    return %c0_i32, %arg0 : i32, i32
  }
  func.func @transform_1(%arg0: i32) -> (i32, i32) {
    %c0_i32 = arith.constant 0 : i32
    %c0_i32_0 = arith.constant 0 : i32
    return %c0_i32, %arg0 : i32, i32
  }
  func.func @transform_2(%arg0: i32) -> (i32, i32) {
    %c0_i32 = arith.constant 0 : i32
    %c0_i32_0 = arith.constant 0 : i32
    %c0_i32_1 = arith.constant 0 : i32
    return %c0_i32, %c0_i32_0 : i32, i32
  }
  func.func @transform_3(%arg0: i32) -> (i32, i32) {
    %c0_i32 = arith.constant 0 : i32
    %c0_i32_0 = arith.constant 0 : i32
    %c0_i32_1 = arith.constant 0 : i32
    return %c0_i32, %c0_i32_0 : i32, i32
  }
  func.func @transform_4(%arg0: i32) -> (i32, i32) {
    %c0_i32 = arith.constant 0 : i32
    %c0_i32_0 = arith.constant 0 : i32
    %c0_i32_1 = arith.constant 0 : i32
    return %c0_i32, %c0_i32_0 : i32, i32
  }
  func.func @transform_5(%arg0: i32) -> (i32, i32) {
    %c0_i32 = arith.constant 0 : i32
    %c0_i32_0 = arith.constant 0 : i32
    %c0_i32_1 = arith.constant 0 : i32
    return %c0_i32, %c0_i32_0 : i32, i32
  }
  func.func @transform_6(%arg0: i32) -> (i32, i32) {
    %c0_i32 = arith.constant 0 : i32
    %c0_i32_0 = arith.constant 0 : i32
    %c0_i32_1 = arith.constant 0 : i32
    return %c0_i32, %c0_i32_0 : i32, i32
  }
  func.func @transform_7(%arg0: i32) -> (i32, i32) {
    %c0_i32 = arith.constant 0 : i32
    %c0_i32_0 = arith.constant 0 : i32
    %c0_i32_1 = arith.constant 0 : i32
    return %c0_i32, %c0_i32_0 : i32, i32
  }
  func.func @transform_8(%arg0: i32) -> (i32, i32) {
    %c0_i32 = arith.constant 0 : i32
    %c0_i32_0 = arith.constant 0 : i32
    %c0_i32_1 = arith.constant 0 : i32
    return %c0_i32, %c0_i32_0 : i32, i32
  }
  func.func @transform_9(%arg0: i32) -> (i32, i32) {
    %c0_i32 = arith.constant 0 : i32
    %c0_i32_0 = arith.constant 0 : i32
    return %c0_i32, %arg0 : i32, i32
  }
}

</mosaic_0001>

<llo_original>
// kernel: critic_forward.1
$region0: #{critic_forward.1}
  #allocation0 [shape = 'u32[]', space=smem, size = 0x4, offset = 0x4, fixed_abs, tag = 'smem constant byte address 0x4 - core index']
  #allocation1 [shape = 'u32[144,128]{1,0:T(1,128)}', space=vmem, size = 0x12000, scoped, tag = 'internal scratch']
  #allocation2 [shape = 'f32[1,1]{1,0:T(1,128)S(1)}', space=vmem, size = 0x200, scoped, tag = 'scoped memory for critic_forward.1']
  %s0 = inlined_call_operand.vmem [shape: f32[24,128], index: 0, kind: input, shape index: {}]
  %s1 = inlined_call_operand.vmem [shape: f32[8,128], index: 1, kind: input, shape index: {}]
  %s2 = inlined_call_operand.vmem [shape: f32[32,24], index: 2, kind: input, shape index: {}]
  %s3 = inlined_call_operand.vmem [shape: f32[32,8], index: 3, kind: input, shape index: {}]
  %s4 = inlined_call_operand.vmem [shape: f32[32,1], index: 4, kind: input, shape index: {}]
  %s5 = inlined_call_operand.vmem [shape: f32[16,32], index: 5, kind: input, shape index: {}]
  %s6 = inlined_call_operand.vmem [shape: f32[16,1], index: 6, kind: input, shape index: {}]
  %s7 = inlined_call_operand.vmem [shape: f32[1,16], index: 7, kind: input, shape index: {}]
  %s8 = inlined_call_operand.<no memory space> [shape: f32[1,1], index: 8, kind: input, shape index: {}]
  %s9 = inlined_call_operand.hbm [shape: f32[1,128], index: 9, kind: output, shape index: {}]
  %s10 = sld [smem:[#allocation0]]
  $region46: #{critic_forward.1} parent=0
    _
  %s12 = ssub.s32 1, %s10
  %s13 = scalar_select 0, %s12, %s10
  %v14 = vstv %s8
  %15 = vst [vmem:[#allocation2] sm:$0x1] %v14
  $region1: #{critic_forward.1} parent=0
    #allocation3 [shape = 'u8[512]{0}', space=vmem, size = 0x400, scoped, tag = 'output window, operand 0, single buffered']
    #allocation4 [shape = 's32[1]{0}', space=sflag, size = 0x4, scoped, tag = 'scoped memory for critic_forward.1']
    %16 = vsyncpa [#allocation4], 0
    // Predicated region
    $region2: #{critic_forward.1} parent=1 // pred_check
      _
    $region3: #{critic_forward.1} parent=1 // pred_check_branch
      %18 = sbr.rel (0) target = $region5
    $region4: #{critic_forward.1} parent=1 // pred_region
      _
    $region5: #{critic_forward.1} parent=1 // pred_fallthru
      _
    // Predicated region
    $region6: #{critic_forward.1} parent=1 // pred_check
      _
    $region7: #{critic_forward.1} parent=1 // pred_check_branch
      %20 = sbr.rel (0) target = $region9
    $region8: #{critic_forward.1} parent=1 // pred_region
      _
    $region9: #{critic_forward.1} parent=1 // pred_fallthru
      _
    // Predicated region
    $region10: #{critic_forward.1} parent=1 // pred_check
      _
    $region11: #{critic_forward.1} parent=1 // pred_check_branch
      %22 = sbr.rel (0) target = $region13
    $region12: #{critic_forward.1} parent=1 // pred_region
      _
    $region13: #{critic_forward.1} parent=1 // pred_fallthru
      _
    // Predicated region
    $region14: #{critic_forward.1} parent=1 // pred_check
      _
    $region15: #{critic_forward.1} parent=1 // pred_check_branch
      %24 = sbr.rel (0) target = $region17
    $region16: #{critic_forward.1} parent=1 // pred_region
      _
    $region17: #{critic_forward.1} parent=1 // pred_fallthru
      _
    // Predicated region
    $region18: #{critic_forward.1} parent=1 // pred_check
      _
    $region19: #{critic_forward.1} parent=1 // pred_check_branch
      %26 = sbr.rel (0) target = $region21
    $region20: #{critic_forward.1} parent=1 // pred_region
      _
    $region21: #{critic_forward.1} parent=1 // pred_fallthru
      _
    // Predicated region
    $region22: #{critic_forward.1} parent=1 // pred_check
      _
    $region23: #{critic_forward.1} parent=1 // pred_check_branch
      %28 = sbr.rel (0) target = $region25
    $region24: #{critic_forward.1} parent=1 // pred_region
      _
    $region25: #{critic_forward.1} parent=1 // pred_fallthru
      _
    // Predicated region
    $region26: #{critic_forward.1} parent=1 // pred_check
      _
    $region27: #{critic_forward.1} parent=1 // pred_check_branch
      %30 = sbr.rel (0) target = $region29
    $region28: #{critic_forward.1} parent=1 // pred_region
      _
    $region29: #{critic_forward.1} parent=1 // pred_fallthru
      _
    // Predicated region
    $region30: #{critic_forward.1} parent=1 // pred_check
      _
    $region31: #{critic_forward.1} parent=1 // pred_check_branch
      %32 = sbr.rel (0) target = $region33
    $region32: #{critic_forward.1} parent=1 // pred_region
      _
    $region33: #{critic_forward.1} parent=1 // pred_fallthru
      _
    // Predicated region
    $region34: #{critic_forward.1} parent=1 // pred_check
      _
    $region35: #{critic_forward.1} parent=1 // pred_check_branch
      %34 = sbr.rel (0) target = $region37
    $region36: #{critic_forward.1} parent=1 // pred_region
      _
    $region37: #{critic_forward.1} parent=1 // pred_fallthru
      _
    %v35 = vld [vmem:[%s2] sm:$0xff]
    %v36 = vld [vmem:[%s2 + $0x8] sm:$0xff]
    %v37 = vld [vmem:[%s2 + $0x10] sm:$0xff]
    %v38 = vld [vmem:[%s2 + $0x18] sm:$0xff]
    %v39 = vld [vmem:[%s0] sm:$0xff]
    %v40 = vld [vmem:[%s0 + $0x8] sm:$0xff]
    %v41 = vld [vmem:[%s0 + $0x10] sm:$0xff]
    %v42 = vld [vmem:[%s3] sm:$0xff]
    %v43 = vld [vmem:[%s3 + $0x8] sm:$0xff]
    %v44 = vld [vmem:[%s3 + $0x10] sm:$0xff]
    %v45 = vld [vmem:[%s3 + $0x18] sm:$0xff]
    %v46 = vld [vmem:[%s1] sm:$0xff]
    %vm47 = vcmask 64512
    %v49 = vsel %vm47, %v42, 0
    %v52 = vsel %vm47, %v43, 0
    %v55 = vsel %vm47, %v44, 0
    %v58 = vsel %vm47, %v45, 0
    %60 = vmatprep.subr.mxu0 0.0
    %61 = vmatpush1.msra.mxu0 %v46
    %62 = vmatprep.subr.mxu0 0.0
    %63 = vmatpush1.msra.mxu0 0.0
    %64 = vmatprep.subr.mxu0 0.0
    %65 = vmatpush1.msra.mxu0 0.0
    %66 = vmatprep.subr.mxu0 0.0
    %67 = vmatpush1.msra.mxu0 0.0
    %68 = vmatprep.subr.mxu0 0.0
    %69 = vmatpush1.msra.mxu0 0.0
    %70 = vmatprep.subr.mxu0 0.0
    %71 = vmatpush1.msra.mxu0 0.0
    %72 = vmatprep.subr.mxu0 0.0
    %73 = vmatpush1.msra.mxu0 0.0
    %74 = vmatprep.subr.mxu0 0.0
    %75 = vmatpush1.msra.mxu0 0.0
    %76 = vmatprep.subr.mxu0 0.0
    %77 = vmatpush1.msra.mxu0 0.0
    %78 = vmatprep.subr.mxu0 0.0
    %79 = vmatpush1.msra.mxu0 0.0
    %80 = vmatprep.subr.mxu0 0.0
    %81 = vmatpush1.msra.mxu0 0.0
    %82 = vmatprep.subr.mxu0 0.0
    %83 = vmatpush1.msra.mxu0 0.0
    %84 = vmatprep.subr.mxu0 0.0
    %85 = vmatpush1.msra.mxu0 0.0
    %86 = vmatprep.subr.mxu0 0.0
    %87 = vmatpush1.msra.mxu0 0.0
    %88 = vmatprep.subr.mxu0 0.0
    %89 = vmatpush1.msra.mxu0 0.0
    %90 = vmatprep.subr.mxu0 0.0
    %91 = vmatpush1.msra.mxu0 0.0
    %92 = vmatprep.subr.mxu0 0.0
    %93 = vmatpush1.msra.mxu0 0.0
    %94 = vmatprep.subr.mxu0 0.0
    %95 = vmatpush1.msra.mxu0 0.0
    %96 = vmatprep.subr.mxu0 0.0
    %97 = vmatpush1.msra.mxu0 0.0
    %98 = vmatprep.subr.mxu0 0.0
    %99 = vmatpush1.msra.mxu0 0.0
    %100 = vmatprep.subr.mxu0 0.0
    %101 = vmatpush1.msra.mxu0 0.0
    %102 = vmatprep.subr.mxu0 0.0
    %103 = vmatpush1.msra.mxu0 0.0
    %104 = vmatprep.subr.mxu0 0.0
    %105 = vmatpush1.msra.mxu0 0.0
    %106 = vmatprep.subr.mxu0 0.0
    %107 = vmatpush1.msra.mxu0 0.0
    %108 = vmatprep.subr.mxu0 0.0
    %109 = vmatpush1.msra.mxu0 0.0
    %110 = vmatprep.subr.mxu0 0.0
    %111 = vmatpush1.msra.mxu0 0.0
    %112 = vmatprep.subr.mxu0 0.0
    %113 = vmatpush1.msra.mxu0 0.0
    %114 = vmatprep.subr.mxu0 0.0
    %115 = vmatpush1.msra.mxu0 0.0
    %116 = vmatprep.subr.mxu0 0.0
    %117 = vmatpush1.msra.mxu0 0.0
    %118 = vmatprep.subr.mxu0 0.0
    %119 = vmatpush1.msra.mxu0 0.0
    %120 = vmatprep.subr.mxu0 0.0
    %121 = vmatpush1.msra.mxu0 0.0
    %122 = vmatprep.subr.mxu0 0.0
    %123 = vmatpush1.msra.mxu0 0.0
    %124 = vmatprep.mubr.f32.mxu0 0.0
    %125 = vmatmul.mubr.f32.gmra.mrb[0].mxu0 %v49
    %v126 = vpop.f32.mrb[0].mxu0
    %v127 = vadd.f32 0.0, %v126
    %v128 = vpop.f32.mrb[0].mxu0
    %129 = vmatprep.mubr.f32.mxu0 0.0
    %130 = vmatmul.mubr.f32.gmra.mrb[0].mxu0 %v52
    %v131 = vpop.f32.mrb[0].mxu0
    %v132 = vadd.f32 0.0, %v131
    %v133 = vpop.f32.mrb[0].mxu0
    %134 = vmatprep.mubr.f32.mxu0 0.0
    %135 = vmatmul.mubr.f32.gmra.mrb[0].mxu0 %v55
    %v136 = vpop.f32.mrb[0].mxu0
    %v137 = vadd.f32 0.0, %v136
    %v138 = vpop.f32.mrb[0].mxu0
    %139 = vmatprep.mubr.f32.mxu0 0.0
    %140 = vmatmul.mubr.f32.gmra.mrb[0].mxu0 %v58
    %v141 = vpop.f32.mrb[0].mxu0
    %v142 = vadd.f32 0.0, %v141
    %v143 = vpop.f32.mrb[0].mxu0
    %144 = vdwg.mxu0
    %vm145 = vcmask 195584
    %v147 = vsel %vm145, %v35, 0
    %v150 = vsel %vm145, %v36, 0
    %v153 = vsel %vm145, %v37, 0
    %v156 = vsel %vm145, %v38, 0
    %158 = vmatprep.subr.mxu0 0.0
    %159 = vmatpush1.msra.mxu0 %v39
    %160 = vmatprep.subr.mxu0 0.0
    %161 = vmatpush1.msra.mxu0 %v40
    %162 = vmatprep.subr.mxu0 0.0
    %163 = vmatpush1.msra.mxu0 %v41
    %164 = vmatprep.subr.mxu0 0.0
    %165 = vmatpush1.msra.mxu0 0.0
    %166 = vmatprep.subr.mxu0 0.0
    %167 = vmatpush1.msra.mxu0 0.0
    %168 = vmatprep.subr.mxu0 0.0
    %169 = vmatpush1.msra.mxu0 0.0
    %170 = vmatprep.subr.mxu0 0.0
    %171 = vmatpush1.msra.mxu0 0.0
    %172 = vmatprep.subr.mxu0 0.0
    %173 = vmatpush1.msra.mxu0 0.0
    %174 = vmatprep.subr.mxu0 0.0
    %175 = vmatpush1.msra.mxu0 0.0
    %176 = vmatprep.subr.mxu0 0.0
    %177 = vmatpush1.msra.mxu0 0.0
    %178 = vmatprep.subr.mxu0 0.0
    %179 = vmatpush1.msra.mxu0 0.0
    %180 = vmatprep.subr.mxu0 0.0
    %181 = vmatpush1.msra.mxu0 0.0
    %182 = vmatprep.subr.mxu0 0.0
    %183 = vmatpush1.msra.mxu0 0.0
    %184 = vmatprep.subr.mxu0 0.0
    %185 = vmatpush1.msra.mxu0 0.0
    %186 = vmatprep.subr.mxu0 0.0
    %187 = vmatpush1.msra.mxu0 0.0
    %188 = vmatprep.subr.mxu0 0.0
    %189 = vmatpush1.msra.mxu0 0.0
    %190 = vmatprep.subr.mxu0 0.0
    %191 = vmatpush1.msra.mxu0 0.0
    %192 = vmatprep.subr.mxu0 0.0
    %193 = vmatpush1.msra.mxu0 0.0
    %194 = vmatprep.subr.mxu0 0.0
    %195 = vmatpush1.msra.mxu0 0.0
    %196 = vmatprep.subr.mxu0 0.0
    %197 = vmatpush1.msra.mxu0 0.0
    %198 = vmatprep.subr.mxu0 0.0
    %199 = vmatpush1.msra.mxu0 0.0
    %200 = vmatprep.subr.mxu0 0.0
    %201 = vmatpush1.msra.mxu0 0.0
    %202 = vmatprep.subr.mxu0 0.0
    %203 = vmatpush1.msra.mxu0 0.0
    %204 = vmatprep.subr.mxu0 0.0
    %205 = vmatpush1.msra.mxu0 0.0
    %206 = vmatprep.subr.mxu0 0.0
    %207 = vmatpush1.msra.mxu0 0.0
    %208 = vmatprep.subr.mxu0 0.0
    %209 = vmatpush1.msra.mxu0 0.0
    %210 = vmatprep.subr.mxu0 0.0
    %211 = vmatpush1.msra.mxu0 0.0
    %212 = vmatprep.subr.mxu0 0.0
    %213 = vmatpush1.msra.mxu0 0.0
    %214 = vmatprep.subr.mxu0 0.0
    %215 = vmatpush1.msra.mxu0 0.0
    %216 = vmatprep.subr.mxu0 0.0
    %217 = vmatpush1.msra.mxu0 0.0
    %218 = vmatprep.subr.mxu0 0.0
    %219 = vmatpush1.msra.mxu0 0.0
    %220 = vmatprep.subr.mxu0 0.0
    %221 = vmatpush1.msra.mxu0 0.0
    %222 = vmatprep.mubr.f32.mxu0 0.0
    %223 = vmatmul.mubr.f32.gmra.mrb[0].mxu0 %v147
    %v224 = vpop.f32.mrb[0].mxu0
    %v225 = vadd.f32 %v127, %v224
    %v226 = vpop.f32.mrb[0].mxu0
    %227 = vmatprep.mubr.f32.mxu0 0.0
    %228 = vmatmul.mubr.f32.gmra.mrb[0].mxu0 %v150
    %v229 = vpop.f32.mrb[0].mxu0
    %v230 = vadd.f32 %v132, %v229
    %v231 = vpop.f32.mrb[0].mxu0
    %232 = vmatprep.mubr.f32.mxu0 0.0
    %233 = vmatmul.mubr.f32.gmra.mrb[0].mxu0 %v153
    %v234 = vpop.f32.mrb[0].mxu0
    %v235 = vadd.f32 %v137, %v234
    %v236 = vpop.f32.mrb[0].mxu0
    %237 = vmatprep.mubr.f32.mxu0 0.0
    %238 = vmatmul.mubr.f32.gmra.mrb[0].mxu0 %v156
    %v239 = vpop.f32.mrb[0].mxu0
    %v240 = vadd.f32 %v142, %v239
    %v241 = vpop.f32.mrb[0].mxu0
    %242 = vdwg.mxu0
    %v243 = vld [vmem:[%s4] sm:$0xff]
    %v244 = vld [vmem:[%s4 + $0x8] sm:$0xff]
    %v245 = vld [vmem:[%s4 + $0x10] sm:$0xff]
    %v246 = vld [vmem:[%s4 + $0x18] sm:$0xff]
    %248 = vset.pattern.permute.xlu0 0
    %249 = vperm.xlu0 %248, %v243
    %v250 = vpop.permute.xlu0 %249
    %253 = vset.pattern.permute.xlu0 0
    %254 = vperm.xlu0 %253, %v244
    %v255 = vpop.permute.xlu0 %254
    %258 = vset.pattern.permute.xlu0 0
    %259 = vperm.xlu0 %258, %v245
    %v260 = vpop.permute.xlu0 %259
    %263 = vset.pattern.permute.xlu0 0
    %264 = vperm.xlu0 %263, %v246
    %v265 = vpop.permute.xlu0 %264
    %v267 = vadd.f32 %v225, %v250
    %v268 = vadd.f32 %v230, %v255
    %v269 = vadd.f32 %v235, %v260
    %v270 = vadd.f32 %v240, %v265
    %v271 = vmax.f32 %v267, 0.0
    %v272 = vmax.f32 %v268, 0.0
    %v273 = vmax.f32 %v269, 0.0
    %v274 = vmax.f32 %v270, 0.0
    %v275 = vld [vmem:[%s5] sm:$0xff]
    %v276 = vld [vmem:[%s5 + $0x8] sm:$0xff]
    %v277 = vld [vmem:[%s6] sm:$0xff]
    %v278 = vld [vmem:[%s6 + $0x8] sm:$0xff]
    %280 = vset.pattern.permute.xlu0 0
    %281 = vperm.xlu0 %280, %v277
    %v282 = vpop.permute.xlu0 %281
    %285 = vset.pattern.permute.xlu0 0
    %286 = vperm.xlu0 %285, %v278
    %v287 = vpop.permute.xlu0 %286
    %vm289 = vcmask 261120
    %v291 = vsel %vm289, %v275, 0
    %v294 = vsel %vm289, %v276, 0
    %296 = vmatprep.subr.mxu0 0.0
    %297 = vmatpush1.msra.mxu0 %v271
    %298 = vmatprep.subr.mxu0 0.0
    %299 = vmatpush1.msra.mxu0 %v272
    %300 = vmatprep.subr.mxu0 0.0
    %301 = vmatpush1.msra.mxu0 %v273
    %302 = vmatprep.subr.mxu0 0.0
    %303 = vmatpush1.msra.mxu0 %v274
    %304 = vmatprep.subr.mxu0 0.0
    %305 = vmatpush1.msra.mxu0 0.0
    %306 = vmatprep.subr.mxu0 0.0
    %307 = vmatpush1.msra.mxu0 0.0
    %308 = vmatprep.subr.mxu0 0.0
    %309 = vmatpush1.msra.mxu0 0.0
    %310 = vmatprep.subr.mxu0 0.0
    %311 = vmatpush1.msra.mxu0 0.0
    %312 = vmatprep.subr.mxu0 0.0
    %313 = vmatpush1.msra.mxu0 0.0
    %314 = vmatprep.subr.mxu0 0.0
    %315 = vmatpush1.msra.mxu0 0.0
    %316 = vmatprep.subr.mxu0 0.0
    %317 = vmatpush1.msra.mxu0 0.0
    %318 = vmatprep.subr.mxu0 0.0
    %319 = vmatpush1.msra.mxu0 0.0
    %320 = vmatprep.subr.mxu0 0.0
    %321 = vmatpush1.msra.mxu0 0.0
    %322 = vmatprep.subr.mxu0 0.0
    %323 = vmatpush1.msra.mxu0 0.0
    %324 = vmatprep.subr.mxu0 0.0
    %325 = vmatpush1.msra.mxu0 0.0
    %326 = vmatprep.subr.mxu0 0.0
    %327 = vmatpush1.msra.mxu0 0.0
    %328 = vmatprep.subr.mxu0 0.0
    %329 = vmatpush1.msra.mxu0 0.0
    %330 = vmatprep.subr.mxu0 0.0
    %331 = vmatpush1.msra.mxu0 0.0
    %332 = vmatprep.subr.mxu0 0.0
    %333 = vmatpush1.msra.mxu0 0.0
    %334 = vmatprep.subr.mxu0 0.0
    %335 = vmatpush1.msra.mxu0 0.0
    %336 = vmatprep.subr.mxu0 0.0
    %337 = vmatpush1.msra.mxu0 0.0
    %338 = vmatprep.subr.mxu0 0.0
    %339 = vmatpush1.msra.mxu0 0.0
    %340 = vmatprep.subr.mxu0 0.0
    %341 = vmatpush1.msra.mxu0 0.0
    %342 = vmatprep.subr.mxu0 0.0
    %343 = vmatpush1.msra.mxu0 0.0
    %344 = vmatprep.subr.mxu0 0.0
    %345 = vmatpush1.msra.mxu0 0.0
    %346 = vmatprep.subr.mxu0 0.0
    %347 = vmatpush1.msra.mxu0 0.0
    %348 = vmatprep.subr.mxu0 0.0
    %349 = vmatpush1.msra.mxu0 0.0
    %350 = vmatprep.subr.mxu0 0.0
    %351 = vmatpush1.msra.mxu0 0.0
    %352 = vmatprep.subr.mxu0 0.0
    %353 = vmatpush1.msra.mxu0 0.0
    %354 = vmatprep.subr.mxu0 0.0
    %355 = vmatpush1.msra.mxu0 0.0
    %356 = vmatprep.subr.mxu0 0.0
    %357 = vmatpush1.msra.mxu0 0.0
    %358 = vmatprep.subr.mxu0 0.0
    %359 = vmatpush1.msra.mxu0 0.0
    %360 = vmatprep.mubr.f32.mxu0 0.0
    %361 = vmatmul.mubr.f32.gmra.mrb[0].mxu0 %v291
    %v362 = vpop.f32.mrb[0].mxu0
    %v363 = vadd.f32 %v282, %v362
    %v364 = vpop.f32.mrb[0].mxu0
    %365 = vmatprep.mubr.f32.mxu0 0.0
    %366 = vmatmul.mubr.f32.gmra.mrb[0].mxu0 %v294
    %v367 = vpop.f32.mrb[0].mxu0
    %v368 = vadd.f32 %v287, %v367
    %v369 = vpop.f32.mrb[0].mxu0
    %370 = vdwg.mxu0
    %v371 = vmax.f32 %v363, 0.0
    %v372 = vmax.f32 %v368, 0.0
    %v373 = vld [vmem:[%s7] sm:$0x1]
    %v374 = vld [vmem:[#allocation2] sm:$0x1]
    %376 = vset.pattern.permute.xlu0 0
    %377 = vperm.xlu0 %376, %v374
    %v378 = vpop.permute.xlu0 %377
    %v380 = vlaneseq
    %v381 = vshrl.u32 %v380, 7
    %v382 = vsub.s32 0, %v381
    %v383 = vrot.slane %v378, %v382
    %vm384 = vcmask 130048
    %v386 = vsel %vm384, %v373, 0
    %388 = vmatprep.subr.mxu0 0.0
    %389 = vmatpush1.msra.mxu0 %v371
    %390 = vmatprep.subr.mxu0 0.0
    %391 = vmatpush1.msra.mxu0 %v372
    %392 = vmatprep.subr.mxu0 0.0
    %393 = vmatpush1.msra.mxu0 0.0
    %394 = vmatprep.subr.mxu0 0.0
    %395 = vmatpush1.msra.mxu0 0.0
    %396 = vmatprep.subr.mxu0 0.0
    %397 = vmatpush1.msra.mxu0 0.0
    %398 = vmatprep.subr.mxu0 0.0
    %399 = vmatpush1.msra.mxu0 0.0
    %400 = vmatprep.subr.mxu0 0.0
    %401 = vmatpush1.msra.mxu0 0.0
    %402 = vmatprep.subr.mxu0 0.0
    %403 = vmatpush1.msra.mxu0 0.0
    %404 = vmatprep.subr.mxu0 0.0
    %405 = vmatpush1.msra.mxu0 0.0
    %406 = vmatprep.subr.mxu0 0.0
    %407 = vmatpush1.msra.mxu0 0.0
    %408 = vmatprep.subr.mxu0 0.0
    %409 = vmatpush1.msra.mxu0 0.0
    %410 = vmatprep.subr.mxu0 0.0
    %411 = vmatpush1.msra.mxu0 0.0
    %412 = vmatprep.subr.mxu0 0.0
    %413 = vmatpush1.msra.mxu0 0.0
    %414 = vmatprep.subr.mxu0 0.0
    %415 = vmatpush1.msra.mxu0 0.0
    %416 = vmatprep.subr.mxu0 0.0
    %417 = vmatpush1.msra.mxu0 0.0
    %418 = vmatprep.subr.mxu0 0.0
    %419 = vmatpush1.msra.mxu0 0.0
    %420 = vmatprep.subr.mxu0 0.0
    %421 = vmatpush1.msra.mxu0 0.0
    %422 = vmatprep.subr.mxu0 0.0
    %423 = vmatpush1.msra.mxu0 0.0
    %424 = vmatprep.subr.mxu0 0.0
    %425 = vmatpush1.msra.mxu0 0.0
    %426 = vmatprep.subr.mxu0 0.0
    %427 = vmatpush1.msra.mxu0 0.0
    %428 = vmatprep.subr.mxu0 0.0
    %429 = vmatpush1.msra.mxu0 0.0
    %430 = vmatprep.subr.mxu0 0.0
    %431 = vmatpush1.msra.mxu0 0.0
    %432 = vmatprep.subr.mxu0 0.0
    %433 = vmatpush1.msra.mxu0 0.0
    %434 = vmatprep.subr.mxu0 0.0
    %435 = vmatpush1.msra.mxu0 0.0
    %436 = vmatprep.subr.mxu0 0.0
    %437 = vmatpush1.msra.mxu0 0.0
    %438 = vmatprep.subr.mxu0 0.0
    %439 = vmatpush1.msra.mxu0 0.0
    %440 = vmatprep.subr.mxu0 0.0
    %441 = vmatpush1.msra.mxu0 0.0
    %442 = vmatprep.subr.mxu0 0.0
    %443 = vmatpush1.msra.mxu0 0.0
    %444 = vmatprep.subr.mxu0 0.0
    %445 = vmatpush1.msra.mxu0 0.0
    %446 = vmatprep.subr.mxu0 0.0
    %447 = vmatpush1.msra.mxu0 0.0
    %448 = vmatprep.subr.mxu0 0.0
    %449 = vmatpush1.msra.mxu0 0.0
    %450 = vmatprep.subr.mxu0 0.0
    %451 = vmatpush1.msra.mxu0 0.0
    %452 = vmatprep.mubr.f32.mxu0 0.0
    %453 = vmatmul.mubr.f32.gmra.mrb[0].mxu0 %v386
    %v454 = vpop.f32.mrb[0].mxu0
    %v455 = vadd.f32 %v383, %v454
    %v456 = vpop.f32.mrb[0].mxu0
    %457 = vdwg.mxu0
    %458 = vst [vmem:[#allocation3] sm:$0x1] %v455
    // Predicated region
    $region38: #{critic_forward.1} parent=1 // pred_check
      _
    $region39: #{critic_forward.1} parent=1 // pred_check_branch
      %460 = sbr.rel (0) target = $region41
    $region40: #{critic_forward.1} parent=1 // pred_region
      %s462 = ssub.s32 16, 16
      %463 = vsyncadd [#allocation4], %s462
      %s465 = sshll.u32 [#allocation3], 4
      %s466 = int_to_ptr.vmem [resolvable:$true] %s465
      %468 = dma.vmem_to_hbm [thread:$0]  %s466, 16, %s9, [#allocation4]
    $region41: #{critic_forward.1} parent=1 // pred_fallthru
      _
    // Predicated region
    $region42: #{critic_forward.1} parent=1 // pred_check
      _
    $region43: #{critic_forward.1} parent=1 // pred_check_branch
      %470 = sbr.rel (0) target = $region45
    $region44: #{critic_forward.1} parent=1 // pred_region
      %471 = dma.done [#allocation4], 16
    $region45: #{critic_forward.1} parent=1 // pred_fallthru
      _
    %472 = vsyncpa [#allocation4], 1

</llo_original>
